<compile_context>
chip_gen: v6e
topology: v6e:2x2x1
jax: 0.10.0
libtpu: 0.0.40
codegen_flags: <defaults>
</compile_context>

<pallas_src>
import jax
import jax.numpy as jnp
from jax.experimental import pallas as pl
from jax.experimental.pallas import tpu as pltpu

C_IN = 64
C_OUT = 112


def _conv1x1_ncl_kernel(x_ref, w_ref, b_ref, o_ref):
    # x_ref: (C_IN, TL)   w_ref: (C_OUT, C_IN)   b_ref: (C_OUT, 1)
    # o_ref: (C_OUT, TL)
    acc = jnp.dot(w_ref[...], x_ref[...], preferred_element_type=jnp.float32)
    o_ref[...] = (acc + b_ref[...]).astype(o_ref.dtype)


def decoder_ai85cnn_cl0_forward(x, weight, bias, *, tl_max=8192):
    """x: (N, 64, L); weight: (112, 64) or (112, 64, 1); bias: (112,).
    Returns (N, 112, L) with the same semantics as the PyTorch module."""
    n, c_in, length = x.shape
    assert c_in == C_IN
    if weight.ndim == 3:  # accept the raw Conv1d layout (C_OUT, C_IN, 1)
        weight = weight.reshape(C_OUT, C_IN)
    assert weight.shape == (C_OUT, C_IN)
    assert bias.shape == (C_OUT,)

    # Lane-axis tile over L: whole L when it fits (any size is legal as a
    # full-extent block), else a 128-multiple tile (the trailing partial
    # block is handled/masked by Pallas).
    tl = length if length <= tl_max else tl_max
    num_l_blocks = pl.cdiv(length, tl)

    b2d = bias.reshape(C_OUT, 1)

    flops = 2 * n * length * C_IN * C_OUT
    bytes_accessed = (
        n * C_IN * length * x.dtype.itemsize      # x read
        + n * C_OUT * length * x.dtype.itemsize   # y write
        + C_OUT * C_IN * weight.dtype.itemsize    # W read
        + C_OUT * bias.dtype.itemsize             # bias read
    )

    return pl.pallas_call(
        _conv1x1_ncl_kernel,
        out_shape=jax.ShapeDtypeStruct((n, C_OUT, length), x.dtype),
        grid=(n, num_l_blocks),
        in_specs=[
            # x tile: batch dim squeezed, channels on sublanes, L-tile on lanes.
            pl.BlockSpec((None, C_IN, tl), lambda b, l: (b, 0, l)),
            # W resident across the whole grid.
            pl.BlockSpec((C_OUT, C_IN), lambda b, l: (0, 0)),
            # bias resident across the whole grid.
            pl.BlockSpec((C_OUT, 1), lambda b, l: (0, 0)),
        ],
        out_specs=pl.BlockSpec((None, C_OUT, tl), lambda b, l: (b, 0, l)),
        compiler_params=pltpu.CompilerParams(
            dimension_semantics=("parallel", "parallel"),
        ),
        cost_estimate=pl.CostEstimate(
            flops=flops, transcendentals=0, bytes_accessed=bytes_accessed
        ),
    )(x, weight, b2d)


def init_params(key):
    """Deterministic init matching nn.Conv1d defaults (kaiming-uniform style
    bounds): weight (112, 64) (kernel dim squeezed), bias (112,)."""
    kw, kb = jax.random.split(key)
    fan_in = C_IN * 1  # in_channels * kernel_size
    bound = 1.0 / (fan_in ** 0.5)
    weight = jax.random.uniform(
        kw, (C_OUT, C_IN), minval=-bound, maxval=bound, dtype=jnp.float32
    )
    bias = jax.random.uniform(
        kb, (C_OUT,), minval=-bound, maxval=bound, dtype=jnp.float32
    )
    return weight, bias


def _reference(x, weight, bias):
    # 1x1 conv == per-position channel matmul + bias.
    return jnp.einsum("ncl,oc->nol", x, weight) + bias[None, :, None]


if __name__ == "__main__":
    key = jax.random.PRNGKey(0)
    kx, kp, kx2, kx3 = jax.random.split(key, 4)
    weight, bias = init_params(kp)

    # Small shapes consistent with the module: batch=2, C_in=64, L=16.
    N, L = 2, 16
    x = jax.random.normal(kx, (N, C_IN, L), dtype=jnp.float32)
    y = jax.block_until_ready(decoder_ai85cnn_cl0_forward(x, weight, bias))
    assert y.shape == (N, C_OUT, L), y.shape
    assert jnp.allclose(y, _reference(x, weight, bias), atol=1e-5, rtol=1e-5)

    # Exercise the multi-block (tiled / double-buffered) path.
    x2 = jax.random.normal(kx2, (1, C_IN, 256), dtype=jnp.float32)
    y2 = jax.block_until_ready(
        decoder_ai85cnn_cl0_forward(x2, weight, bias, tl_max=128)
    )
    assert jnp.allclose(y2, _reference(x2, weight, bias), atol=1e-5, rtol=1e-5)

    # Exercise a partial (masked) trailing L-block.
    x3 = jax.random.normal(kx3, (1, C_IN, 200), dtype=jnp.float32)
    y3 = jax.block_until_ready(
        decoder_ai85cnn_cl0_forward(x3, weight, bias, tl_max=128)
    )
    assert jnp.allclose(y3, _reference(x3, weight, bias), atol=1e-5, rtol=1e-5)

    print("KERNEL_OK")
</pallas_src>

<mosaic_0001>
module attributes {stable_mosaic.version = 11 : i64} {
  func.func @_conv1x1_ncl_kernel(%arg0: i32, %arg1: i32, %arg2: memref<1x64x16xf32, #tpu.memory_space<vmem>>, %arg3: memref<112x64xf32, #tpu.memory_space<vmem>>, %arg4: memref<112x1xf32, #tpu.memory_space<vmem>>, %arg5: memref<1x112x16xf32, #tpu.memory_space<vmem>>) attributes {dimension_semantics = [#tpu.dimension_semantics<parallel>, #tpu.dimension_semantics<parallel>], iteration_bounds = array<i64: 2, 1>, scalar_prefetch = 0 : i64, scratch_operands = 0 : i64, tpu.core_type = #tpu.core_type<tc>, window_params = [{transform_indices = @transform_0, window_bounds = array<i64: 1, 64, 16>}, {pipeline_mode = #tpu.pipeline_mode<synchronous>, transform_indices = @transform_1, window_bounds = array<i64: 112, 64>}, {pipeline_mode = #tpu.pipeline_mode<synchronous>, transform_indices = @transform_2, window_bounds = array<i64: 112, 1>}, {transform_indices = @transform_3, window_bounds = array<i64: 1, 112, 16>}]} {
    %c0 = arith.constant 0 : index
    %c0_0 = arith.constant 0 : index
    %0 = vector.load %arg3[%c0, %c0_0] : memref<112x64xf32, #tpu.memory_space<vmem>>, vector<112x64xf32>
    %c0_1 = arith.constant 0 : index
    %c0_2 = arith.constant 0 : index
    %c0_3 = arith.constant 0 : index
    %1 = vector.load %arg2[%c0_1, %c0_2, %c0_3] : memref<1x64x16xf32, #tpu.memory_space<vmem>>, vector<1x64x16xf32>
    %2 = vector.shape_cast %1 : vector<1x64x16xf32> to vector<64x16xf32>
    %cst = arith.constant dense<0.000000e+00> : vector<112x16xf32>
    %3 = tpu.matmul %0, %2, %cst {dimension_numbers = #tpu.dot_dimension_numbers<[1], [0], [0], [1], [0, 0, 1, 1], [], []>} : vector<112x64xf32>, vector<64x16xf32>, vector<112x16xf32> -> vector<112x16xf32>
    %c0_4 = arith.constant 0 : index
    %c0_5 = arith.constant 0 : index
    %4 = vector.load %arg4[%c0_4, %c0_5] : memref<112x1xf32, #tpu.memory_space<vmem>>, vector<112x1xf32>
    %5 = vector.broadcast %4 : vector<112x1xf32> to vector<112x16xf32>
    %6 = arith.addf %3, %5 : vector<112x16xf32>
    %c0_6 = arith.constant 0 : index
    %c0_7 = arith.constant 0 : index
    %c0_8 = arith.constant 0 : index
    %7 = vector.load %arg5[%c0_6, %c0_7, %c0_8] : memref<1x112x16xf32, #tpu.memory_space<vmem>>, vector<1x112x16xf32>
    %8 = vector.shape_cast %7 : vector<1x112x16xf32> to vector<112x16xf32>
    %9 = vector.shape_cast %6 : vector<112x16xf32> to vector<1x112x16xf32>
    tpu.vector_store %arg5[%c0_6, %c0_7, %c0_8], %9 {strides = array<i32>} : memref<1x112x16xf32, #tpu.memory_space<vmem>>, vector<1x112x16xf32>,
    return
  }
  func.func @transform_0(%arg0: i32, %arg1: i32) -> (i32, i32, i32) {
    %c0_i32 = arith.constant 0 : i32
    %c0_i32_0 = arith.constant 0 : i32
    return %arg0, %c0_i32, %arg1 : i32, i32, i32
  }
  func.func @transform_1(%arg0: i32, %arg1: i32) -> (i32, i32) {
    %c0_i32 = arith.constant 0 : i32
    %c0_i32_0 = arith.constant 0 : i32
    %c0_i32_1 = arith.constant 0 : i32
    return %c0_i32, %c0_i32_0 : i32, i32
  }
  func.func @transform_2(%arg0: i32, %arg1: i32) -> (i32, i32) {
    %c0_i32 = arith.constant 0 : i32
    %c0_i32_0 = arith.constant 0 : i32
    %c0_i32_1 = arith.constant 0 : i32
    return %c0_i32, %c0_i32_0 : i32, i32
  }
  func.func @transform_3(%arg0: i32, %arg1: i32) -> (i32, i32, i32) {
    %c0_i32 = arith.constant 0 : i32
    %c0_i32_0 = arith.constant 0 : i32
    return %arg0, %c0_i32, %arg1 : i32, i32, i32
  }
}

</mosaic_0001>

<llo_original>
// kernel: tpu_custom_call.1
$region0: #{tpu_custom_call.1}
  #allocation0 [shape = 'u32[]', space=smem, size = 0x4, offset = 0x4, fixed_abs, tag = 'smem constant byte address 0x4 - core index']
  #allocation1 [shape = 'u32[144,128]{1,0:T(1,128)}', space=vmem, size = 0x12000, scoped, tag = 'internal scratch']
  %s0 = inlined_call_operand.vmem [shape: f32[2,64,16], index: 0, kind: input, shape index: {}]
  %s1 = inlined_call_operand.vmem [shape: f32[112,64], index: 1, kind: input, shape index: {}]
  %s2 = inlined_call_operand.vmem [shape: f32[112,1], index: 2, kind: input, shape index: {}]
  %s3 = inlined_call_operand.vmem [shape: f32[2,112,16], index: 3, kind: output, shape index: {}]
  %s4 = sld [smem:[#allocation0]]
  $region45: #{tpu_custom_call.1} parent=0
    _
  %s6 = ssub.s32 1, %s4
  %s7 = scalar_select 0, %s6, %s4
  loop: start=0, step=1, limit=4
  $region2: #{tpu_custom_call.1} parent=0 // loop_pre_header
    _
  $region3: #{tpu_custom_call.1} parent=0 // loop_header
    %s9 = sphi 0, %s13
    %p10 = scmp.ge.s32.totalorder %s9, 4
    %s16 = sphi 0, %s28
    %s17 = sphi 0, %s24
    %s18 = sphi 0, %s16
    %s19 = sphi 0, %s17
    %s20 = sphi 0, %s18
    %s21 = sphi 0, %s19
    %s33 = sphi 0, %s35
    %s36 = sphi 0, %s33
    %s37 = sphi 0, %s36
    %s53 = sphi 0, %s37
    %s57 = sphi 0, %s57
    %s59 = sphi 0, %s57
    %s60 = sphi 0, %s59
    %s74 = sphi 0, %s60
    %s78 = sphi 0, %s78
    %s80 = sphi 0, %s78
    %s81 = sphi 0, %s80
    %s95 = sphi 0, %s81
    %s103 = sphi 0, %s105
    %s106 = sphi 0, %s103
    %s107 = sphi 0, %s106
    %s123 = sphi 0, %s107
  $region4: #{tpu_custom_call.1} parent=0 // loop_header_branch
    %12 = sbr.rel (%p10) target = $region8
  $region5: #{tpu_custom_call.1} parent=0 // loop_body
    %s14 = ssub.s32 %s9, 1
    %s15 = ssub.s32 %s9, 2
    %s22 = sadd.s32 1, %s17
    %p23 = scmp.ge.s32.totalorder %s22, 1
    %s24 = scalar_select %p23, 0, %s22
    %s25 = sadd.s32 1, %s16
    %s26 = scalar_select %p23, %s25, %s16
    %p27 = scmp.ge.s32.totalorder %s26, 2
    %s28 = scalar_select %p27, 0, %s26
    %s29 = ssub.s32 %s16, %s28
    %s30 = ssub.s32 %s17, %s24
    %s31 = sor.u32 %s29, %s30
    %p32 = scmp.eq.s32.totalorder %s31, 0
    %s34 = sadd.s32 %s33, 1
    %s35 = scalar_select %p32, %s33, %s34
    %p38 = pneg %p32
    %p39 = scmp.eq.s32.totalorder %s9, 1
    %p40 = por %p38, %p39
    %p41 = scmp.ne.s32.totalorder %s33, %s36
    %p42 = scmp.eq.s32.totalorder %s9, 0
    %p43 = por %p41, %p42
    %p44 = scmp.ne.s32.totalorder %s33, %s36
    %p45 = scmp.eq.s32.totalorder %s14, 1
    %p46 = por %p44, %p45
    %p47 = scmp.ne.s32.totalorder %s36, %s37
    %p48 = scmp.eq.s32.totalorder %s14, 0
    %p49 = por %p47, %p48
    %p50 = scmp.ne.s32.totalorder %s36, %s37
    %p51 = scmp.eq.s32.totalorder %s15, 1
    %p52 = por %p50, %p51
    %p54 = scmp.ne.s32.totalorder %s37, %s53
    %p55 = scmp.eq.s32.totalorder %s15, 0
    %p56 = por %p54, %p55
    %s58 = sadd.s32 %s57, 1
    %p61 = scmp.eq.s32.totalorder %s9, 1
    %p62 = scmp.ne.s32.totalorder %s57, %s59
    %p63 = scmp.eq.s32.totalorder %s9, 0
    %p64 = por %p62, %p63
    %p65 = scmp.ne.s32.totalorder %s57, %s59
    %p66 = scmp.eq.s32.totalorder %s14, 1
    %p67 = por %p65, %p66
    %p68 = scmp.ne.s32.totalorder %s59, %s60
    %p69 = scmp.eq.s32.totalorder %s14, 0
    %p70 = por %p68, %p69
    %p71 = scmp.ne.s32.totalorder %s59, %s60
    %p72 = scmp.eq.s32.totalorder %s15, 1
    %p73 = por %p71, %p72
    %p75 = scmp.ne.s32.totalorder %s60, %s74
    %p76 = scmp.eq.s32.totalorder %s15, 0
    %p77 = por %p75, %p76
    %s79 = sadd.s32 %s78, 1
    %p82 = scmp.eq.s32.totalorder %s9, 1
    %p83 = scmp.ne.s32.totalorder %s78, %s80
    %p84 = scmp.eq.s32.totalorder %s9, 0
    %p85 = por %p83, %p84
    %p86 = scmp.ne.s32.totalorder %s78, %s80
    %p87 = scmp.eq.s32.totalorder %s14, 1
    %p88 = por %p86, %p87
    %p89 = scmp.ne.s32.totalorder %s80, %s81
    %p90 = scmp.eq.s32.totalorder %s14, 0
    %p91 = por %p89, %p90
    %p92 = scmp.ne.s32.totalorder %s80, %s81
    %p93 = scmp.eq.s32.totalorder %s15, 1
    %p94 = por %p92, %p93
    %p96 = scmp.ne.s32.totalorder %s81, %s95
    %p97 = scmp.eq.s32.totalorder %s15, 0
    %p98 = por %p96, %p97
    %s99 = ssub.s32 %s16, %s28
    %s100 = ssub.s32 %s17, %s24
    %s101 = sor.u32 %s99, %s100
    %p102 = scmp.eq.s32.totalorder %s101, 0
    %s104 = sadd.s32 %s103, 1
    %s105 = scalar_select %p102, %s103, %s104
    %p108 = pneg %p102
    %p109 = scmp.eq.s32.totalorder %s9, 1
    %p110 = por %p108, %p109
    %p111 = scmp.ne.s32.totalorder %s103, %s106
    %p112 = scmp.eq.s32.totalorder %s9, 0
    %p113 = por %p111, %p112
    %p114 = scmp.ne.s32.totalorder %s103, %s106
    %p115 = scmp.eq.s32.totalorder %s14, 1
    %p116 = por %p114, %p115
    %p117 = scmp.ne.s32.totalorder %s106, %s107
    %p118 = scmp.eq.s32.totalorder %s14, 0
    %p119 = por %p117, %p118
    %p120 = scmp.ne.s32.totalorder %s106, %s107
    %p121 = scmp.eq.s32.totalorder %s15, 1
    %p122 = por %p120, %p121
    %p124 = scmp.ne.s32.totalorder %s107, %s123
    %p125 = scmp.eq.s32.totalorder %s15, 0
    %p126 = por %p124, %p125
    %p127 = scmp.le.s32.totalorder 1, %s9
    %p128 = scmp.lt.s32.totalorder %s9, 3
    %p129 = pnand %p127, %p128
    %p130 = pneg %p129
    // Predicated region
    $region9: #{tpu_custom_call.1} parent=5 // pred_check
      _
    $region10: #{tpu_custom_call.1} parent=5 // pred_check_branch
      %132 = sbr.rel (%p129) target = $region12
    $region11: #{tpu_custom_call.1} parent=5 // pred_region
      %s133 = ssub.s32 %s9, 1
      // Predicated region
      $region13: #{tpu_custom_call.1} parent=11 // pred_check
        %p134 = pneg %p70
      $region14: #{tpu_custom_call.1} parent=11 // pred_check_branch
        %136 = sbr.rel (%p134) target = $region16
      $region15: #{tpu_custom_call.1} parent=11 // pred_region
        _
      $region16: #{tpu_custom_call.1} parent=11 // pred_fallthru
        _
      // Predicated region
      $region17: #{tpu_custom_call.1} parent=11 // pred_check
        %p137 = pneg %p91
      $region18: #{tpu_custom_call.1} parent=11 // pred_check_branch
        %139 = sbr.rel (%p137) target = $region20
      $region19: #{tpu_custom_call.1} parent=11 // pred_region
        _
      $region20: #{tpu_custom_call.1} parent=11 // pred_fallthru
        _
    $region12: #{tpu_custom_call.1} parent=5 // pred_fallthru
      _
    %p140 = scmp.lt.s32.totalorder %s9, 2
    // Predicated region
    $region21: #{tpu_custom_call.1} parent=5 // pred_check
      %p141 = pneg %p140
    $region22: #{tpu_custom_call.1} parent=5 // pred_check_branch
      %143 = sbr.rel (%p141) target = $region24
    $region23: #{tpu_custom_call.1} parent=5 // pred_region
      // Predicated region
      $region25: #{tpu_custom_call.1} parent=23 // pred_check
        %p144 = pneg %p43
      $region26: #{tpu_custom_call.1} parent=23 // pred_check_branch
        %146 = sbr.rel (%p144) target = $region28
      $region27: #{tpu_custom_call.1} parent=23 // pred_region
        %p147 = scmp.lt.s32.totalorder %s16, 1
        %s148 = scalar_select %p147, %s16, 1
        %p149 = scmp.lt.s32.totalorder %s17, 0
        %s150 = scalar_select %p149, %s17, 0
        %s151 = smul.addr %s148, 8
        %s152 = sadd.s32 %s150, %s151
        %s153 = smul.addr %s152, 8
        %s154 = scalar_lea.vmem %s0, %s153
      $region28: #{tpu_custom_call.1} parent=23 // pred_fallthru
        _
    $region24: #{tpu_custom_call.1} parent=5 // pred_fallthru
      _
    %p155 = scmp.le.s32.totalorder 1, %s9
    %p156 = scmp.lt.s32.totalorder %s9, 3
    %p157 = pnand %p155, %p156
    %p158 = pneg %p157
    // Predicated region
    $region29: #{tpu_custom_call.1} parent=5 // pred_check
      _
    $region30: #{tpu_custom_call.1} parent=5 // pred_check_branch
      %160 = sbr.rel (%p157) target = $region32
    $region31: #{tpu_custom_call.1} parent=5 // pred_region
      %s161 = ssub.s32 %s9, 1
      %p162 = scmp.lt.s32.totalorder %s18, 1
      %s163 = scalar_select %p162, %s18, 1
      %p164 = scmp.lt.s32.totalorder %s19, 0
      %s165 = scalar_select %p164, %s19, 0
      %s166 = smul.addr %s163, 8
      %s167 = sadd.s32 %s165, %s166
      %s168 = smul.addr %s167, 8
      %s169 = scalar_lea.vmem %s0, %s168
      %p170 = pneg %p49
      %p171 = pneg %p46
      %p172 = pneg %p70
      %p173 = pneg %p67
      %p174 = pneg %p91
      %p175 = pneg %p88
      %p176 = pneg %p119
      %p177 = pneg %p116
      %p178 = scmp.lt.s32.totalorder %s18, 1
      %s179 = scalar_select %p178, %s18, 1
      %p180 = scmp.lt.s32.totalorder %s19, 0
      %s181 = scalar_select %p180, %s19, 0
      %s182 = smul.addr %s179, 14
      %s183 = sadd.s32 %s181, %s182
      %s184 = smul.addr %s183, 8
      %s185 = scalar_lea.vmem %s3, %s184
      %p186 = scmp.lt.s32.totalorder %s18, 1
      %s187 = scalar_select %p186, %s18, 1
      %p188 = scmp.lt.s32.totalorder %s19, 0
      %s189 = scalar_select %p188, %s19, 0
      %s190 = smul.addr %s187, 8
      %s191 = sadd.s32 %s189, %s190
      %s192 = smul.addr %s191, 8
      %s193 = scalar_lea.vmem %s0, %s192
      %p194 = scmp.lt.s32.totalorder %s18, 1
      %s195 = scalar_select %p194, %s18, 1
      %p196 = scmp.lt.s32.totalorder %s19, 0
      %s197 = scalar_select %p196, %s19, 0
      %s198 = smul.addr %s195, 14
      %s199 = sadd.s32 %s197, %s198
      %s200 = smul.addr %s199, 8
      %s201 = scalar_lea.vmem %s3, %s200
      %v202 = vld [vmem:[%s1] sm:$0xff]
      %v203 = vld [vmem:[%s1 + $0x8] sm:$0xff]
      %v204 = vld [vmem:[%s1 + $0x10] sm:$0xff]
      %v205 = vld [vmem:[%s1 + $0x18] sm:$0xff]
      %v206 = vld [vmem:[%s1 + $0x20] sm:$0xff]
      %v207 = vld [vmem:[%s1 + $0x28] sm:$0xff]
      %v208 = vld [vmem:[%s1 + $0x30] sm:$0xff]
      %v209 = vld [vmem:[%s1 + $0x38] sm:$0xff]
      %v210 = vld [vmem:[%s1 + $0x40] sm:$0xff]
      %v211 = vld [vmem:[%s1 + $0x48] sm:$0xff]
      %v212 = vld [vmem:[%s1 + $0x50] sm:$0xff]
      %v213 = vld [vmem:[%s1 + $0x58] sm:$0xff]
      %v214 = vld [vmem:[%s1 + $0x60] sm:$0xff]
      %v215 = vld [vmem:[%s1 + $0x68] sm:$0xff]
      %v216 = vld [vmem:[%s193] sm:$0xff]
      %v217 = vld [vmem:[%s193 + $0x8] sm:$0xff]
      %v218 = vld [vmem:[%s193 + $0x10] sm:$0xff]
      %v219 = vld [vmem:[%s193 + $0x18] sm:$0xff]
      %v220 = vld [vmem:[%s193 + $0x20] sm:$0xff]
      %v221 = vld [vmem:[%s193 + $0x28] sm:$0xff]
      %v222 = vld [vmem:[%s193 + $0x30] sm:$0xff]
      %v223 = vld [vmem:[%s193 + $0x38] sm:$0xff]
      %v224 = vld [vmem:[%s2] sm:$0xff]
      %v225 = vld [vmem:[%s2 + $0x8] sm:$0xff]
      %v226 = vld [vmem:[%s2 + $0x10] sm:$0xff]
      %v227 = vld [vmem:[%s2 + $0x18] sm:$0xff]
      %v228 = vld [vmem:[%s2 + $0x20] sm:$0xff]
      %v229 = vld [vmem:[%s2 + $0x28] sm:$0xff]
      %v230 = vld [vmem:[%s2 + $0x30] sm:$0xff]
      %v231 = vld [vmem:[%s2 + $0x38] sm:$0xff]
      %v232 = vld [vmem:[%s2 + $0x40] sm:$0xff]
      %v233 = vld [vmem:[%s2 + $0x48] sm:$0xff]
      %v234 = vld [vmem:[%s2 + $0x50] sm:$0xff]
      %v235 = vld [vmem:[%s2 + $0x58] sm:$0xff]
      %v236 = vld [vmem:[%s2 + $0x60] sm:$0xff]
      %v237 = vld [vmem:[%s2 + $0x68] sm:$0xff]
      %239 = vset.pattern.permute.xlu0 0
      %240 = vperm.xlu0 %239, %v224
      %v241 = vpop.permute.xlu0 %240
      %244 = vset.pattern.permute.xlu0 0
      %245 = vperm.xlu0 %244, %v225
      %v246 = vpop.permute.xlu0 %245
      %249 = vset.pattern.permute.xlu0 0
      %250 = vperm.xlu0 %249, %v226
      %v251 = vpop.permute.xlu0 %250
      %254 = vset.pattern.permute.xlu0 0
      %255 = vperm.xlu0 %254, %v227
      %v256 = vpop.permute.xlu0 %255
      %259 = vset.pattern.permute.xlu0 0
      %260 = vperm.xlu0 %259, %v228
      %v261 = vpop.permute.xlu0 %260
      %264 = vset.pattern.permute.xlu0 0
      %265 = vperm.xlu0 %264, %v229
      %v266 = vpop.permute.xlu0 %265
      %269 = vset.pattern.permute.xlu0 0
      %270 = vperm.xlu0 %269, %v230
      %v271 = vpop.permute.xlu0 %270
      %274 = vset.pattern.permute.xlu0 0
      %275 = vperm.xlu0 %274, %v231
      %v276 = vpop.permute.xlu0 %275
      %279 = vset.pattern.permute.xlu0 0
      %280 = vperm.xlu0 %279, %v232
      %v281 = vpop.permute.xlu0 %280
      %284 = vset.pattern.permute.xlu0 0
      %285 = vperm.xlu0 %284, %v233
      %v286 = vpop.permute.xlu0 %285
      %289 = vset.pattern.permute.xlu0 0
      %290 = vperm.xlu0 %289, %v234
      %v291 = vpop.permute.xlu0 %290
      %294 = vset.pattern.permute.xlu0 0
      %295 = vperm.xlu0 %294, %v235
      %v296 = vpop.permute.xlu0 %295
      %299 = vset.pattern.permute.xlu0 0
      %300 = vperm.xlu0 %299, %v236
      %v301 = vpop.permute.xlu0 %300
      %304 = vset.pattern.permute.xlu0 0
      %305 = vperm.xlu0 %304, %v237
      %v306 = vpop.permute.xlu0 %305
      %vm308 = vcmask 523264
      %v310 = vsel %vm308, %v202, 0
      %v313 = vsel %vm308, %v203, 0
      %v316 = vsel %vm308, %v204, 0
      %v319 = vsel %vm308, %v205, 0
      %v322 = vsel %vm308, %v206, 0
      %v325 = vsel %vm308, %v207, 0
      %v328 = vsel %vm308, %v208, 0
      %v331 = vsel %vm308, %v209, 0
      %v334 = vsel %vm308, %v210, 0
      %v337 = vsel %vm308, %v211, 0
      %v340 = vsel %vm308, %v212, 0
      %v343 = vsel %vm308, %v213, 0
      %v346 = vsel %vm308, %v214, 0
      %v349 = vsel %vm308, %v215, 0
      %351 = vmatprep.subr.mxu0 0.0
      %352 = vmatpush1.msra.mxu0 0.0
      %353 = vmatprep.subr.mxu0 0.0
      %354 = vmatpush1.msra.mxu0 0.0
      %355 = vmatprep.subr.mxu0 0.0
      %356 = vmatpush1.msra.mxu0 0.0
      %357 = vmatprep.subr.mxu0 0.0
      %358 = vmatpush1.msra.mxu0 0.0
      %359 = vmatprep.subr.mxu0 0.0
      %360 = vmatpush1.msra.mxu0 0.0
      %361 = vmatprep.subr.mxu0 0.0
      %362 = vmatpush1.msra.mxu0 0.0
      %363 = vmatprep.subr.mxu0 0.0
      %364 = vmatpush1.msra.mxu0 0.0
      %365 = vmatprep.subr.mxu0 0.0
      %366 = vmatpush1.msra.mxu0 0.0
      %367 = vmatprep.subr.mxu0 0.0
      %368 = vmatpush1.msra.mxu0 %v223
      %369 = vmatprep.subr.mxu0 0.0
      %370 = vmatpush1.msra.mxu0 %v222
      %371 = vmatprep.subr.mxu0 0.0
      %372 = vmatpush1.msra.mxu0 %v221
      %373 = vmatprep.subr.mxu0 0.0
      %374 = vmatpush1.msra.mxu0 %v220
      %375 = vmatprep.subr.mxu0 0.0
      %376 = vmatpush1.msra.mxu0 %v219
      %377 = vmatprep.subr.mxu0 0.0
      %378 = vmatpush1.msra.mxu0 %v218
      %379 = vmatprep.subr.mxu0 0.0
      %380 = vmatpush1.msra.mxu0 %v217
      %381 = vmatprep.subr.mxu0 0.0
      %382 = vmatpush1.msra.mxu0 %v216
      %383 = vmatprep.subr.mxu0 0.0
      %384 = vmatpush2.msra.mxu0 0.0
      %385 = vmatprep.subr.mxu0 0.0
      %386 = vmatpush2.msra.mxu0 0.0
      %387 = vmatprep.subr.mxu0 0.0
      %388 = vmatpush2.msra.mxu0 0.0
      %389 = vmatprep.subr.mxu0 0.0
      %390 = vmatpush2.msra.mxu0 0.0
      %391 = vmatprep.subr.mxu0 0.0
      %392 = vmatpush2.msra.mxu0 0.0
      %393 = vmatprep.subr.mxu0 0.0
      %394 = vmatpush2.msra.mxu0 0.0
      %395 = vmatprep.subr.mxu0 0.0
      %396 = vmatpush2.msra.mxu0 0.0
      %397 = vmatprep.subr.mxu0 0.0
      %398 = vmatpush2.msra.mxu0 0.0
      %399 = vmatprep.subr.mxu0 0.0
      %400 = vmatpush2.msra.mxu0 0.0
      %401 = vmatprep.subr.mxu0 0.0
      %402 = vmatpush2.msra.mxu0 0.0
      %403 = vmatprep.subr.mxu0 0.0
      %404 = vmatpush2.msra.mxu0 0.0
      %405 = vmatprep.subr.mxu0 0.0
      %406 = vmatpush2.msra.mxu0 0.0
      %407 = vmatprep.subr.mxu0 0.0
      %408 = vmatpush2.msra.mxu0 0.0
      %409 = vmatprep.subr.mxu0 0.0
      %410 = vmatpush2.msra.mxu0 0.0
      %411 = vmatprep.subr.mxu0 0.0
      %412 = vmatpush2.msra.mxu0 0.0
      %413 = vmatprep.subr.mxu0 0.0
      %414 = vmatpush2.msra.mxu0 0.0
      %415 = vmatprep.mubr.f32.mxu0 0.0
      %416 = vmatmul.mubr.f32.gmra.mxu0 %v310
      %v417 = vpop.f32.mrf.mxu0
      %v418 = vadd.f32 %v241, %v417
      %v419 = vpop.f32.mrf.mxu0
      %420 = vmatprep.mubr.f32.mxu0 0.0
      %421 = vmatmul.mubr.f32.gmra.mxu0 %v313
      %v422 = vpop.f32.mrf.mxu0
      %v423 = vadd.f32 %v246, %v422
      %v424 = vpop.f32.mrf.mxu0
      %425 = vmatprep.mubr.f32.mxu0 0.0
      %426 = vmatmul.mubr.f32.gmra.mxu0 %v316
      %v427 = vpop.f32.mrf.mxu0
      %v428 = vadd.f32 %v251, %v427
      %v429 = vpop.f32.mrf.mxu0
      %430 = vmatprep.mubr.f32.mxu0 0.0
      %431 = vmatmul.mubr.f32.gmra.mxu0 %v319
      %v432 = vpop.f32.mrf.mxu0
      %v433 = vadd.f32 %v256, %v432
      %v434 = vpop.f32.mrf.mxu0
      %435 = vmatprep.mubr.f32.mxu0 0.0
      %436 = vmatmul.mubr.f32.gmra.mxu0 %v322
      %v437 = vpop.f32.mrf.mxu0
      %v438 = vadd.f32 %v261, %v437
      %v439 = vpop.f32.mrf.mxu0
      %440 = vmatprep.mubr.f32.mxu0 0.0
      %441 = vmatmul.mubr.f32.gmra.mxu0 %v325
      %v442 = vpop.f32.mrf.mxu0
      %v443 = vadd.f32 %v266, %v442
      %v444 = vpop.f32.mrf.mxu0
      %445 = vmatprep.mubr.f32.mxu0 0.0
      %446 = vmatmul.mubr.f32.gmra.mxu0 %v328
      %v447 = vpop.f32.mrf.mxu0
      %v448 = vadd.f32 %v271, %v447
      %v449 = vpop.f32.mrf.mxu0
      %450 = vmatprep.mubr.f32.mxu0 0.0
      %451 = vmatmul.mubr.f32.gmra.mxu0 %v331
      %v452 = vpop.f32.mrf.mxu0
      %v453 = vadd.f32 %v276, %v452
      %v454 = vpop.f32.mrf.mxu0
      %455 = vmatprep.mubr.f32.mxu0 0.0
      %456 = vmatmul.mubr.f32.gmra.mxu0 %v334
      %v457 = vpop.f32.mrf.mxu0
      %v458 = vadd.f32 %v281, %v457
      %v459 = vpop.f32.mrf.mxu0
      %460 = vmatprep.mubr.f32.mxu0 0.0
      %461 = vmatmul.mubr.f32.gmra.mxu0 %v337
      %v462 = vpop.f32.mrf.mxu0
      %v463 = vadd.f32 %v286, %v462
      %v464 = vpop.f32.mrf.mxu0
      %465 = vmatprep.mubr.f32.mxu0 0.0
      %466 = vmatmul.mubr.f32.gmra.mxu0 %v340
      %v467 = vpop.f32.mrf.mxu0
      %v468 = vadd.f32 %v291, %v467
      %v469 = vpop.f32.mrf.mxu0
      %470 = vmatprep.mubr.f32.mxu0 0.0
      %471 = vmatmul.mubr.f32.gmra.mxu0 %v343
      %v472 = vpop.f32.mrf.mxu0
      %v473 = vadd.f32 %v296, %v472
      %v474 = vpop.f32.mrf.mxu0
      %475 = vmatprep.mubr.f32.mxu0 0.0
      %476 = vmatmul.mubr.f32.gmra.mxu0 %v346
      %v477 = vpop.f32.mrf.mxu0
      %v478 = vadd.f32 %v301, %v477
      %v479 = vpop.f32.mrf.mxu0
      %480 = vmatprep.mubr.f32.mxu0 0.0
      %481 = vmatmul.mubr.f32.gmra.mxu0 %v349
      %v482 = vpop.f32.mrf.mxu0
      %v483 = vadd.f32 %v306, %v482
      %v484 = vpop.f32.mrf.mxu0
      %485 = vdwg.mxu0
      %vm486 = vcmask 130048
      %487 = vst.msk [vmem:[%s201] sm:$0xff] %vm486, %v418
      %488 = vst.msk [vmem:[%s201 + $0x8] sm:$0xff] %vm486, %v423
      %489 = vst.msk [vmem:[%s201 + $0x10] sm:$0xff] %vm486, %v428
      %490 = vst.msk [vmem:[%s201 + $0x18] sm:$0xff] %vm486, %v433
      %491 = vst.msk [vmem:[%s201 + $0x20] sm:$0xff] %vm486, %v438
      %492 = vst.msk [vmem:[%s201 + $0x28] sm:$0xff] %vm486, %v443
      %493 = vst.msk [vmem:[%s201 + $0x30] sm:$0xff] %vm486, %v448
      %494 = vst.msk [vmem:[%s201 + $0x38] sm:$0xff] %vm486, %v453
      %495 = vst.msk [vmem:[%s201 + $0x40] sm:$0xff] %vm486, %v458
      %496 = vst.msk [vmem:[%s201 + $0x48] sm:$0xff] %vm486, %v463
      %497 = vst.msk [vmem:[%s201 + $0x50] sm:$0xff] %vm486, %v468
      %498 = vst.msk [vmem:[%s201 + $0x58] sm:$0xff] %vm486, %v473
      %499 = vst.msk [vmem:[%s201 + $0x60] sm:$0xff] %vm486, %v478
      %500 = vst.msk [vmem:[%s201 + $0x68] sm:$0xff] %vm486, %v483
      %p501 = scmp.lt.s32.totalorder %s18, 1
      %s502 = scalar_select %p501, %s18, 1
      %p503 = scmp.lt.s32.totalorder %s19, 0
      %s504 = scalar_select %p503, %s19, 0
      %s505 = smul.addr %s502, 14
      %s506 = sadd.s32 %s504, %s505
      %s507 = smul.addr %s506, 8
      %s508 = scalar_lea.vmem %s3, %s507
      // Predicated region
      $region33: #{tpu_custom_call.1} parent=31 // pred_check
        %p509 = pneg %p116
      $region34: #{tpu_custom_call.1} parent=31 // pred_check_branch
        %511 = sbr.rel (%p509) target = $region36
      $region35: #{tpu_custom_call.1} parent=31 // pred_region
        _
      $region36: #{tpu_custom_call.1} parent=31 // pred_fallthru
        _
    $region32: #{tpu_custom_call.1} parent=5 // pred_fallthru
      _
    %p512 = scmp.le.s32.totalorder 2, %s9
    // Predicated region
    $region37: #{tpu_custom_call.1} parent=5 // pred_check
      %p513 = pneg %p512
    $region38: #{tpu_custom_call.1} parent=5 // pred_check_branch
      %515 = sbr.rel (%p513) target = $region40
    $region39: #{tpu_custom_call.1} parent=5 // pred_region
      %s516 = ssub.s32 %s9, 2
      // Predicated region
      $region41: #{tpu_custom_call.1} parent=39 // pred_check
        %p517 = pneg %p122
      $region42: #{tpu_custom_call.1} parent=39 // pred_check_branch
        %519 = sbr.rel (%p517) target = $region44
      $region43: #{tpu_custom_call.1} parent=39 // pred_region
        %p520 = scmp.lt.s32.totalorder %s20, 1
        %s521 = scalar_select %p520, %s20, 1
        %p522 = scmp.lt.s32.totalorder %s21, 0
        %s523 = scalar_select %p522, %s21, 0
        %s524 = smul.addr %s521, 14
        %s525 = sadd.s32 %s523, %s524
        %s526 = smul.addr %s525, 8
        %s527 = scalar_lea.vmem %s3, %s526
      $region44: #{tpu_custom_call.1} parent=39 // pred_fallthru
        _
    $region40: #{tpu_custom_call.1} parent=5 // pred_fallthru
      _
  $region6: #{tpu_custom_call.1} parent=0 // loop_footer
    %s13 = sadd.s32 1, %s9
  $region7: #{tpu_custom_call.1} parent=0 // loop_footer_branch
    %8 = sbr.rel target = $region3
  $region8: #{tpu_custom_call.1} parent=0 // loop_exit
    _

</llo_original>
